<compile_context>
chip_gen: v6e
topology: v6e:2x2x1
jax: 0.10.0
libtpu: 0.0.40
codegen_flags: <defaults>
</compile_context>

<pallas_src>
import functools

import jax
import jax.numpy as jnp
from jax import lax
from jax.experimental import pallas as pl
from jax.experimental.pallas import tpu as pltpu


# --------------------------------------------------------------------------- #
# Kernels
# --------------------------------------------------------------------------- #
def _reduce_kernel(x_ref, h_ref, w_ref, m1_ref, edeg_ref, *, project_first):
    """Pass 1: M1 = D_e @ H^T @ Y, accumulated over N-row tiles.

    x_ref:    (tn, Fip)  f32   node-feature tile
    h_ref:    (tn, Ep)   bf16  incidence tile (0/1 -> exact in bf16)
    w_ref:    (Fip, Fop) f32   projection weight (used only if project_first)
    m1_ref:   (Ep, F)    f32   output, resident across the whole grid (accumulator)
    edeg_ref: (Ep, 1)    f32   scratch, edge-degree accumulator
    """
    n = pl.program_id(0)

    @pl.when(n == 0)
    def _init():
        m1_ref[...] = jnp.zeros_like(m1_ref)
        edeg_ref[...] = jnp.zeros_like(edeg_ref)

    h = h_ref[...]                                     # (tn, Ep) bf16, 0/1

    if project_first:
        # Fout < Fin: project first so the narrower width flows through the
        # two O(N*E*F) propagation matmuls.
        y = jnp.dot(x_ref[...].astype(jnp.bfloat16),
                    w_ref[...].astype(jnp.bfloat16),
                    preferred_element_type=jnp.float32)        # (tn, Fop)
    else:
        y = x_ref[...]                                         # (tn, Fip)

    # M1 += H_tile^T @ Y without materializing H^T: contract the node axis of
    # BOTH operands so Mosaic folds the transpose into the MXU operand push.
    m1_ref[...] += lax.dot_general(
        h, y.astype(jnp.bfloat16),
        dimension_numbers=(((0,), (0,)), ((), ())),
        preferred_element_type=jnp.float32)                    # (Ep, F)

    # edge_deg += H_tile^T @ 1 on the MXU (exact: 0/1 operands, f32 accumulate).
    ones_n = jnp.ones((h.shape[0], 1), dtype=jnp.bfloat16)
    edeg_ref[...] += lax.dot_general(
        h, ones_n,
        dimension_numbers=(((0,), (0,)), ((), ())),
        preferred_element_type=jnp.float32)                    # (Ep, 1)

    @pl.when(n == pl.num_programs(0) - 1)
    def _finalize():
        # Fold D_e into M1. Padded (zero-degree) edges have all-zero M1 rows,
        # so the huge 1/(0+1e-6) inverse multiplies zeros and stays harmless.
        inv_e = 1.0 / (edeg_ref[...] + 1e-6)                   # exact, (Ep, 1)
        m1_ref[...] = inv_e * m1_ref[...]


def _prop_kernel(h_ref, m1_ref, w_ref, o_ref, *, project_first):
    """Pass 2: out_tile = D_v_tile @ H_tile @ M1 (@ W if not projected yet).

    h_ref:  (tn, Ep)   bf16   incidence tile
    m1_ref: (Ep, F)    f32    D_e @ H^T @ Y from pass 1
    w_ref:  (Fip, Fop) f32    projection weight (used only if NOT project_first)
    o_ref:  (tn, Fop)  f32    output tile
    """
    h = h_ref[...]                                             # (tn, Ep) bf16

    # node_deg = H_tile @ 1 on the MXU (exact), then exact inverse.
    ones_e = jnp.ones((h.shape[1], 1), dtype=jnp.bfloat16)
    node_deg = jnp.dot(h, ones_e, preferred_element_type=jnp.float32)  # (tn, 1)
    inv_v = 1.0 / (node_deg + 1e-6)

    prop = inv_v * jnp.dot(h, m1_ref[...].astype(jnp.bfloat16),
                           preferred_element_type=jnp.float32)         # (tn, F)

    if project_first:
        o_ref[...] = prop
    else:
        o_ref[...] = jnp.dot(prop.astype(jnp.bfloat16),
                             w_ref[...].astype(jnp.bfloat16),
                             preferred_element_type=jnp.float32)


# --------------------------------------------------------------------------- #
# Wrapper
# --------------------------------------------------------------------------- #
def _round_up(x, m):
    return ((x + m - 1) // m) * m


def _vmem_limit_bytes():
    """Per-generation VMEM budget: ~7/8 of physical, capped at 112 MiB."""
    try:
        cap = pltpu.get_tpu_info().vmem_capacity_bytes
    except Exception:
        cap = 64 * 1024 * 1024
    if not cap:
        cap = 64 * 1024 * 1024
    return int(min(cap * 7 // 8, 112 * 1024 * 1024))


def hypergraph_conv(X, H, W, *, tile_n=256):
    """X: (N, Fin), H: (N, E) 0/1 incidence, W: (Fin, Fout) -> (N, Fout) f32."""
    N, Fin = X.shape
    _, E = H.shape
    _, Fout = W.shape

    project_first = Fout < Fin          # propagate the narrower feature width
    vmem_limit = _vmem_limit_bytes()

    # Lane-dense padding: E / F dims to multiples of 128; N tiles to a
    # multiple of 16 (bf16 packs 16 rows per sublane group).
    Ep = _round_up(E, 128)
    Fip = _round_up(Fin, 128)
    Fop = _round_up(Fout, 128)
    F = Fop if project_first else Fip

    tn = min(_round_up(tile_n, 16), _round_up(N, 16))

    def _vmem_estimate(t):
        return (2 * t * Ep * 2            # bf16 H tile, double-buffered
                + 2 * t * Fip * 4         # f32 X tile, double-buffered
                + 2 * Fip * Fop * 4       # W block
                + Ep * F * 4 + Ep * 4     # resident M1 accumulator + edge-deg
                + 2 * t * Fop * 4)        # output tile

    # Shrink the N-tile until double-buffered blocks fit the VMEM budget.
    while tn > 16 and _vmem_estimate(tn) > int(vmem_limit * 0.8):
        tn = max(16, _round_up(tn // 2, 16))

    Np = _round_up(N, tn)
    num_tiles = Np // tn

    # H is 0/1: bf16 storage is exact, halves HBM traffic + VMEM footprint of
    # the dominant operand. Cast BEFORE padding (no padded f32 copy of H).
    Hbf = jnp.pad(H.astype(jnp.bfloat16), ((0, Np - N), (0, Ep - E)))
    Xp = jnp.pad(X.astype(jnp.float32), ((0, Np - N), (0, Fip - Fin)))
    Wp = jnp.pad(W.astype(jnp.float32), ((0, Fip - Fin), (0, Fop - Fout)))

    def cparams(semantics):
        return pltpu.CompilerParams(dimension_semantics=semantics,
                                    vmem_limit_bytes=vmem_limit)

    # ---- Pass 1: M1 = D_e @ H^T @ Y, reduced over N-tiles ("arbitrary"). ----
    reduce_cost = pl.CostEstimate(
        flops=2 * Np * Ep * (F + 1) + (2 * Np * Fip * Fop if project_first else 0),
        transcendentals=0,
        bytes_accessed=Np * Fip * 4 + Np * Ep * 2 + Fip * Fop * 4 + Ep * F * 4)

    m1 = pl.pallas_call(
        functools.partial(_reduce_kernel, project_first=project_first),
        out_shape=jax.ShapeDtypeStruct((Ep, F), jnp.float32),
        grid_spec=pltpu.PrefetchScalarGridSpec(
            num_scalar_prefetch=0,
            grid=(num_tiles,),
            in_specs=[
                pl.BlockSpec((tn, Fip), lambda n: (n, 0)),
                pl.BlockSpec((tn, Ep), lambda n: (n, 0)),
                pl.BlockSpec((Fip, Fop), lambda n: (0, 0)),
            ],
            out_specs=pl.BlockSpec((Ep, F), lambda n: (0, 0)),
            scratch_shapes=[pltpu.VMEM((Ep, 1), jnp.float32)],
        ),
        compiler_params=cparams(("arbitrary",)),
        cost_estimate=reduce_cost,
    )(Xp, Hbf, Wp)

    # ---- Pass 2: out = D_v @ H @ M1 (@ W), parallel over N-tiles (megacore). ----
    prop_cost = pl.CostEstimate(
        flops=2 * Np * Ep * (F + 1) + (0 if project_first else 2 * Np * Fip * Fop),
        transcendentals=0,
        bytes_accessed=Np * Ep * 2 + Ep * F * 4 + Fip * Fop * 4 + Np * Fop * 4)

    out_p = pl.pallas_call(
        functools.partial(_prop_kernel, project_first=project_first),
        out_shape=jax.ShapeDtypeStruct((Np, Fop), jnp.float32),
        grid_spec=pltpu.PrefetchScalarGridSpec(
            num_scalar_prefetch=0,
            grid=(num_tiles,),
            in_specs=[
                pl.BlockSpec((tn, Ep), lambda n: (n, 0)),
                pl.BlockSpec((Ep, F), lambda n: (0, 0)),
                pl.BlockSpec((Fip, Fop), lambda n: (0, 0)),
            ],
            out_specs=pl.BlockSpec((tn, Fop), lambda n: (n, 0)),
        ),
        compiler_params=cparams(("parallel",)),
        cost_estimate=prop_cost,
    )(Hbf, m1, Wp)

    return out_p[:N, :Fout]


# --------------------------------------------------------------------------- #
# Reference + init helpers
# --------------------------------------------------------------------------- #
def xavier_uniform(key, shape, dtype=jnp.float32):
    fan_in, fan_out = shape[0], shape[1]
    bound = (6.0 / (fan_in + fan_out)) ** 0.5
    return jax.random.uniform(key, shape, dtype=dtype, minval=-bound, maxval=bound)


def reference_forward(X, H, W):
    """Pure-JAX f32 reference mirroring the PyTorch module exactly."""
    D_v = jnp.diag(1.0 / (jnp.sum(H, axis=1) + 1e-6))
    D_e = jnp.diag(1.0 / (jnp.sum(H, axis=0) + 1e-6))
    Xp = D_v @ (H @ (D_e @ (H.T @ X)))
    return Xp @ W


if __name__ == "__main__":
    key = jax.random.PRNGKey(0)
    k_x, k_h, k_w, k_a = jax.random.split(key, 4)

    n_nodes, n_edges = 16, 8
    in_features, out_features = 32, 32

    X = jax.random.normal(k_x, (n_nodes, in_features), dtype=jnp.float32)
    # Binary incidence matrix (node belongs to hyperedge with p=0.5).
    H = jax.random.bernoulli(k_h, 0.5, (n_nodes, n_edges)).astype(jnp.float32)

    # Deterministic Xavier-uniform parameter init (as in reset_parameters()).
    W = xavier_uniform(k_w, (in_features, out_features))
    # attn_weight exists in __init__ but is never used in forward().
    attn_weight = xavier_uniform(k_a, (out_features, 1))  # noqa: F841

    out = hypergraph_conv(X, H, W)
    jax.block_until_ready(out)

    ref = reference_forward(X, H, W)
    assert out.shape == (n_nodes, out_features)
    # Degree inverses are now exact; remaining drift comes only from bf16 MXU
    # operands, well inside this tolerance.
    assert jnp.allclose(out, ref, atol=5e-2, rtol=5e-2), "mismatch vs reference"

    print("KERNEL_OK")
</pallas_src>

<mosaic_0001>
module attributes {stable_mosaic.version = 11 : i64} {
  func.func @_reduce_kernel(%arg0: i32, %arg1: memref<16x128xf32, #tpu.memory_space<vmem>>, %arg2: memref<16x128xbf16, #tpu.memory_space<vmem>>, %arg3: memref<128x128xf32, #tpu.memory_space<vmem>>, %arg4: memref<128x128xf32, #tpu.memory_space<vmem>>, %arg5: memref<128x1xf32, #tpu.memory_space<vmem>>) attributes {dimension_semantics = [#tpu.dimension_semantics<arbitrary>], iteration_bounds = array<i64: 1>, scalar_prefetch = 0 : i64, scratch_operands = 1 : i64, tpu.core_type = #tpu.core_type<tc>, window_params = [{transform_indices = @transform_0, window_bounds = array<i64: 16, 128>}, {transform_indices = @transform_1, window_bounds = array<i64: 16, 128>}, {pipeline_mode = #tpu.pipeline_mode<synchronous>, transform_indices = @transform_2, window_bounds = array<i64: 128, 128>}, {pipeline_mode = #tpu.pipeline_mode<synchronous>, transform_indices = @transform_3, window_bounds = array<i64: 128, 128>}]} {
    %c0_i32 = arith.constant 0 : i32
    %0 = arith.cmpi eq, %arg0, %c0_i32 : i32
    %1 = arith.extui %0 : i1 to i32
    %c0_i32_0 = arith.constant 0 : i32
    %2 = arith.cmpi ne, %1, %c0_i32_0 : i32
    scf.if %2 {
      %cst_16 = arith.constant 0.000000e+00 : f32
      %18 = vector.broadcast %cst_16 : f32 to vector<128x128xf32>
      %c0_17 = arith.constant 0 : index
      %c0_18 = arith.constant 0 : index
      %19 = vector.load %arg4[%c0_17, %c0_18] : memref<128x128xf32, #tpu.memory_space<vmem>>, vector<128x128xf32>
      tpu.vector_store %arg4[%c0_17, %c0_18], %18 {strides = array<i32>} : memref<128x128xf32, #tpu.memory_space<vmem>>, vector<128x128xf32>,
      %cst_19 = arith.constant 0.000000e+00 : f32
      %20 = vector.broadcast %cst_19 : f32 to vector<128x1xf32>
      %c0_20 = arith.constant 0 : index
      %c0_21 = arith.constant 0 : index
      %21 = vector.load %arg5[%c0_20, %c0_21] : memref<128x1xf32, #tpu.memory_space<vmem>>, vector<128x1xf32>
      tpu.vector_store %arg5[%c0_20, %c0_21], %20 {strides = array<i32>} : memref<128x1xf32, #tpu.memory_space<vmem>>, vector<128x1xf32>,
    } else {
    }
    %c0 = arith.constant 0 : index
    %c0_1 = arith.constant 0 : index
    %3 = vector.load %arg2[%c0, %c0_1] : memref<16x128xbf16, #tpu.memory_space<vmem>>, vector<16x128xbf16>
    %c0_2 = arith.constant 0 : index
    %c0_3 = arith.constant 0 : index
    %4 = vector.load %arg1[%c0_2, %c0_3] : memref<16x128xf32, #tpu.memory_space<vmem>>, vector<16x128xf32>
    %c0_4 = arith.constant 0 : index
    %c0_5 = arith.constant 0 : index
    %5 = vector.load %arg4[%c0_4, %c0_5] : memref<128x128xf32, #tpu.memory_space<vmem>>, vector<128x128xf32>
    %6 = arith.truncf %4 : vector<16x128xf32> to vector<16x128xbf16>
    %cst = arith.constant dense<0.000000e+00> : vector<128x128xf32>
    %7 = tpu.matmul %3, %6, %cst {dimension_numbers = #tpu.dot_dimension_numbers<[0], [0], [1], [1], [0, 1, 1, 1], [], []>} : vector<16x128xbf16>, vector<16x128xbf16>, vector<128x128xf32> -> vector<128x128xf32>
    %8 = arith.addf %5, %7 : vector<128x128xf32>
    %c0_6 = arith.constant 0 : index
    %c0_7 = arith.constant 0 : index
    %9 = vector.load %arg4[%c0_6, %c0_7] : memref<128x128xf32, #tpu.memory_space<vmem>>, vector<128x128xf32>
    tpu.vector_store %arg4[%c0_6, %c0_7], %8 {strides = array<i32>} : memref<128x128xf32, #tpu.memory_space<vmem>>, vector<128x128xf32>,
    %cst_8 = arith.constant 1.000000e+00 : bf16
    %10 = vector.broadcast %cst_8 : bf16 to vector<16x1xbf16>
    %c0_9 = arith.constant 0 : index
    %c0_10 = arith.constant 0 : index
    %11 = vector.load %arg5[%c0_9, %c0_10] : memref<128x1xf32, #tpu.memory_space<vmem>>, vector<128x1xf32>
    %cst_11 = arith.constant dense<0.000000e+00> : vector<128x1xf32>
    %12 = tpu.matmul %3, %10, %cst_11 {dimension_numbers = #tpu.dot_dimension_numbers<[0], [0], [1], [1], [0, 1, 1, 1], [], []>} : vector<16x128xbf16>, vector<16x1xbf16>, vector<128x1xf32> -> vector<128x1xf32>
    %13 = arith.addf %11, %12 : vector<128x1xf32>
    %c0_12 = arith.constant 0 : index
    %c0_13 = arith.constant 0 : index
    %14 = vector.load %arg5[%c0_12, %c0_13] : memref<128x1xf32, #tpu.memory_space<vmem>>, vector<128x1xf32>
    tpu.vector_store %arg5[%c0_12, %c0_13], %13 {strides = array<i32>} : memref<128x1xf32, #tpu.memory_space<vmem>>, vector<128x1xf32>,
    %c0_i32_14 = arith.constant 0 : i32
    %15 = arith.cmpi eq, %arg0, %c0_i32_14 : i32
    %16 = arith.extui %15 : i1 to i32
    %c0_i32_15 = arith.constant 0 : i32
    %17 = arith.cmpi ne, %16, %c0_i32_15 : i32
    scf.if %17 {
      %c0_16 = arith.constant 0 : index
      %c0_17 = arith.constant 0 : index
      %18 = vector.load %arg5[%c0_16, %c0_17] : memref<128x1xf32, #tpu.memory_space<vmem>>, vector<128x1xf32>
      %cst_18 = arith.constant 9.99999997E-7 : f32
      %19 = vector.broadcast %cst_18 : f32 to vector<128x1xf32>
      %20 = arith.addf %18, %19 : vector<128x1xf32>
      %cst_19 = arith.constant 1.000000e+00 : f32
      %21 = vector.broadcast %cst_19 : f32 to vector<128x1xf32>
      %22 = arith.divf %21, %20 : vector<128x1xf32>
      %c0_20 = arith.constant 0 : index
      %c0_21 = arith.constant 0 : index
      %23 = vector.load %arg4[%c0_20, %c0_21] : memref<128x128xf32, #tpu.memory_space<vmem>>, vector<128x128xf32>
      %24 = vector.broadcast %22 : vector<128x1xf32> to vector<128x128xf32>
      %25 = arith.mulf %24, %23 : vector<128x128xf32>
      %c0_22 = arith.constant 0 : index
      %c0_23 = arith.constant 0 : index
      %26 = vector.load %arg4[%c0_22, %c0_23] : memref<128x128xf32, #tpu.memory_space<vmem>>, vector<128x128xf32>
      tpu.vector_store %arg4[%c0_22, %c0_23], %25 {strides = array<i32>} : memref<128x128xf32, #tpu.memory_space<vmem>>, vector<128x128xf32>,
    } else {
    }
    return
  }
  func.func @transform_0(%arg0: i32) -> (i32, i32) {
    %c0_i32 = arith.constant 0 : i32
    %c0_i32_0 = arith.constant 0 : i32
    return %arg0, %c0_i32 : i32, i32
  }
  func.func @transform_1(%arg0: i32) -> (i32, i32) {
    %c0_i32 = arith.constant 0 : i32
    %c0_i32_0 = arith.constant 0 : i32
    return %arg0, %c0_i32 : i32, i32
  }
  func.func @transform_2(%arg0: i32) -> (i32, i32) {
    %c0_i32 = arith.constant 0 : i32
    %c0_i32_0 = arith.constant 0 : i32
    %c0_i32_1 = arith.constant 0 : i32
    return %c0_i32, %c0_i32_0 : i32, i32
  }
  func.func @transform_3(%arg0: i32) -> (i32, i32) {
    %c0_i32 = arith.constant 0 : i32
    %c0_i32_0 = arith.constant 0 : i32
    %c0_i32_1 = arith.constant 0 : i32
    return %c0_i32, %c0_i32_0 : i32, i32
  }
}

</mosaic_0001>

<llo_original>
// kernel: tpu_custom_call.1
$region0: #{tpu_custom_call.1}
  #allocation0 [shape = 'u32[]', space=smem, size = 0x4, offset = 0x4, fixed_abs, tag = 'smem constant byte address 0x4 - core index']
  #allocation1 [shape = 'u32[144,128]{1,0:T(1,128)}', space=vmem, size = 0x12000, scoped, tag = 'internal scratch']
  #allocation2 [shape = 'f32[128,1]{1,0:T(8,128)}', space=vmem, size = 0x10000, scoped, tag = 'scratch operand']
  %s0 = inlined_call_operand.hbm [shape: f32[16,128], index: 0, kind: input, shape index: {}]
  %s1 = inlined_call_operand.hbm [shape: bf16[16,128], index: 1, kind: input, shape index: {}]
  %s2 = inlined_call_operand.hbm [shape: f32[128,128], index: 2, kind: input, shape index: {}]
  %s3 = inlined_call_operand.hbm [shape: f32[128,128], index: 3, kind: output, shape index: {}]
  %s4 = sld [smem:[#allocation0]]
  $region42: #{tpu_custom_call.1} parent=0
    _
  %s6 = ssub.s32 1, %s4
  %s7 = scalar_select 0, %s6, %s4
  $region1: #{tpu_custom_call.1} parent=0
    #allocation3 [shape = 'u8[8192]{0}', space=vmem, size = 0x2000, scoped, tag = 'input window, operand 0, single buffered']
    #allocation4 [shape = 's32[1]{0}', space=sflag, size = 0x4, scoped, tag = 'scoped memory for tpu_custom_call.1']
    #allocation5 [shape = 's32[1]{0}', space=sflag, size = 0x4, scoped, tag = 'scoped memory for tpu_custom_call.1']
    #allocation6 [shape = 'u8[4096]{0}', space=vmem, size = 0x1000, scoped, tag = 'input window, operand 1, single buffered']
    #allocation7 [shape = 's32[1]{0}', space=sflag, size = 0x4, scoped, tag = 'scoped memory for tpu_custom_call.1']
    #allocation8 [shape = 'u8[65536]{0}', space=vmem, size = 0x10000, scoped, tag = 'input window, operand 2, single buffered']
    #allocation9 [shape = 'u8[65536]{0}', space=vmem, size = 0x10000, scoped, tag = 'output window, operand 0, single buffered']
    %8 = vsyncpa [#allocation4], 0
    %9 = vsyncpa [#allocation7], 0
    %10 = vsyncpa [#allocation5], 0
    // Predicated region
    $region2: #{tpu_custom_call.1} parent=1 // pred_check
      _
    $region3: #{tpu_custom_call.1} parent=1 // pred_check_branch
      %12 = sbr.rel (0) target = $region5
    $region4: #{tpu_custom_call.1} parent=1 // pred_region
      %s14 = ssub.s32 256, 256
      %15 = vsyncadd [#allocation4], %s14
      %s16 = sshll.u32 [#allocation3], 4
      %s17 = int_to_ptr.vmem [resolvable:$true] %s16
      %22 = dma.hbm_to_vmem [thread:$0]  %s0, 256, %s17, [#allocation4], 128, 128, 8
    $region5: #{tpu_custom_call.1} parent=1 // pred_fallthru
      _
    // Predicated region
    $region6: #{tpu_custom_call.1} parent=1 // pred_check
      _
    $region7: #{tpu_custom_call.1} parent=1 // pred_check_branch
      %24 = sbr.rel (0) target = $region9
    $region8: #{tpu_custom_call.1} parent=1 // pred_region
      %s26 = ssub.s32 128, 128
      %27 = vsyncadd [#allocation7], %s26
      %s28 = sshll.u32 [#allocation6], 4
      %s29 = int_to_ptr.vmem [resolvable:$true] %s28
      %34 = dma.hbm_to_vmem [thread:$0]  %s1, 128, %s29, [#allocation7], 64, 64, 4
    $region9: #{tpu_custom_call.1} parent=1 // pred_fallthru
      _
    // Predicated region
    $region10: #{tpu_custom_call.1} parent=1 // pred_check
      _
    $region11: #{tpu_custom_call.1} parent=1 // pred_check_branch
      %36 = sbr.rel (0) target = $region13
    $region12: #{tpu_custom_call.1} parent=1 // pred_region
      %s38 = ssub.s32 2048, 2048
      %39 = vsyncadd [#allocation7], %s38
      %s40 = sshll.u32 [#allocation8], 4
      %s41 = int_to_ptr.vmem [resolvable:$true] %s40
      %46 = dma.hbm_to_vmem [thread:$0]  %s2, 2048, %s41, [#allocation7], 128, 128, 8
    $region13: #{tpu_custom_call.1} parent=1 // pred_fallthru
      _
    // Predicated region
    $region14: #{tpu_custom_call.1} parent=1 // pred_check
      _
    $region15: #{tpu_custom_call.1} parent=1 // pred_check_branch
      %48 = sbr.rel (0) target = $region17
    $region16: #{tpu_custom_call.1} parent=1 // pred_region
      %49 = dma.done [#allocation4], 256
    $region17: #{tpu_custom_call.1} parent=1 // pred_fallthru
      _
    // Predicated region
    $region18: #{tpu_custom_call.1} parent=1 // pred_check
      _
    $region19: #{tpu_custom_call.1} parent=1 // pred_check_branch
      %51 = sbr.rel (0) target = $region21
    $region20: #{tpu_custom_call.1} parent=1 // pred_region
      %52 = dma.done [#allocation7], 128
    $region21: #{tpu_custom_call.1} parent=1 // pred_fallthru
      _
    // Predicated region
    $region22: #{tpu_custom_call.1} parent=1 // pred_check
      _
    $region23: #{tpu_custom_call.1} parent=1 // pred_check_branch
      %54 = sbr.rel (0) target = $region25
    $region24: #{tpu_custom_call.1} parent=1 // pred_region
      %55 = dma.done [#allocation7], 2048
    $region25: #{tpu_custom_call.1} parent=1 // pred_fallthru
      _
    %p58 = scmp.eq.s32.totalorder 0, 0
    // Predicated region
    $region26: #{tpu_custom_call.1} parent=1 // pred_check
      %p59 = pneg %p58
    $region27: #{tpu_custom_call.1} parent=1 // pred_check_branch
      %61 = sbr.rel (%p59) target = $region29
    $region28: #{tpu_custom_call.1} parent=1 // pred_region
      %62 = vst [vmem:[#allocation9] sm:$0xff] 0.0
      %63 = vst [vmem:[#allocation9 + $0x8] sm:$0xff] 0.0
      %64 = vst [vmem:[#allocation9 + $0x10] sm:$0xff] 0.0
      %65 = vst [vmem:[#allocation9 + $0x18] sm:$0xff] 0.0
      %66 = vst [vmem:[#allocation9 + $0x20] sm:$0xff] 0.0
      %67 = vst [vmem:[#allocation9 + $0x28] sm:$0xff] 0.0
      %68 = vst [vmem:[#allocation9 + $0x30] sm:$0xff] 0.0
      %69 = vst [vmem:[#allocation9 + $0x38] sm:$0xff] 0.0
      %70 = vst [vmem:[#allocation9 + $0x40] sm:$0xff] 0.0
      %71 = vst [vmem:[#allocation9 + $0x48] sm:$0xff] 0.0
      %72 = vst [vmem:[#allocation9 + $0x50] sm:$0xff] 0.0
      %73 = vst [vmem:[#allocation9 + $0x58] sm:$0xff] 0.0
      %74 = vst [vmem:[#allocation9 + $0x60] sm:$0xff] 0.0
      %75 = vst [vmem:[#allocation9 + $0x68] sm:$0xff] 0.0
      %76 = vst [vmem:[#allocation9 + $0x70] sm:$0xff] 0.0
      %77 = vst [vmem:[#allocation9 + $0x78] sm:$0xff] 0.0
      %vm78 = vcmask 7168
      %79 = vst.msk [vmem:[#allocation2] sm:$0xff] %vm78, 0.0
      %80 = vst.msk [vmem:[#allocation2 + $0x8] sm:$0xff] %vm78, 0.0
      %81 = vst.msk [vmem:[#allocation2 + $0x10] sm:$0xff] %vm78, 0.0
      %82 = vst.msk [vmem:[#allocation2 + $0x18] sm:$0xff] %vm78, 0.0
      %83 = vst.msk [vmem:[#allocation2 + $0x20] sm:$0xff] %vm78, 0.0
      %84 = vst.msk [vmem:[#allocation2 + $0x28] sm:$0xff] %vm78, 0.0
      %85 = vst.msk [vmem:[#allocation2 + $0x30] sm:$0xff] %vm78, 0.0
      %86 = vst.msk [vmem:[#allocation2 + $0x38] sm:$0xff] %vm78, 0.0
      %87 = vst.msk [vmem:[#allocation2 + $0x40] sm:$0xff] %vm78, 0.0
      %88 = vst.msk [vmem:[#allocation2 + $0x48] sm:$0xff] %vm78, 0.0
      %89 = vst.msk [vmem:[#allocation2 + $0x50] sm:$0xff] %vm78, 0.0
      %90 = vst.msk [vmem:[#allocation2 + $0x58] sm:$0xff] %vm78, 0.0
      %91 = vst.msk [vmem:[#allocation2 + $0x60] sm:$0xff] %vm78, 0.0
      %92 = vst.msk [vmem:[#allocation2 + $0x68] sm:$0xff] %vm78, 0.0
      %93 = vst.msk [vmem:[#allocation2 + $0x70] sm:$0xff] %vm78, 0.0
      %94 = vst.msk [vmem:[#allocation2 + $0x78] sm:$0xff] %vm78, 0.0
    $region29: #{tpu_custom_call.1} parent=1 // pred_fallthru
      _
    %v95 = vld [vmem:[#allocation6] sm:$0xf]
    %v96 = vld [vmem:[#allocation6 + $0x4] sm:$0xf]
    %v97 = vld [vmem:[#allocation3] sm:$0xff]
    %v98 = vld [vmem:[#allocation3 + $0x8] sm:$0xff]
    %v99 = vld [vmem:[#allocation9] sm:$0xff]
    %v100 = vld [vmem:[#allocation9 + $0x8] sm:$0xff]
    %v101 = vld [vmem:[#allocation9 + $0x10] sm:$0xff]
    %v102 = vld [vmem:[#allocation9 + $0x18] sm:$0xff]
    %v103 = vld [vmem:[#allocation9 + $0x20] sm:$0xff]
    %v104 = vld [vmem:[#allocation9 + $0x28] sm:$0xff]
    %v105 = vld [vmem:[#allocation9 + $0x30] sm:$0xff]
    %v106 = vld [vmem:[#allocation9 + $0x38] sm:$0xff]
    %v107 = vld [vmem:[#allocation9 + $0x40] sm:$0xff]
    %v108 = vld [vmem:[#allocation9 + $0x48] sm:$0xff]
    %v109 = vld [vmem:[#allocation9 + $0x50] sm:$0xff]
    %v110 = vld [vmem:[#allocation9 + $0x58] sm:$0xff]
    %v111 = vld [vmem:[#allocation9 + $0x60] sm:$0xff]
    %v112 = vld [vmem:[#allocation9 + $0x68] sm:$0xff]
    %v113 = vld [vmem:[#allocation9 + $0x70] sm:$0xff]
    %v114 = vld [vmem:[#allocation9 + $0x78] sm:$0xff]
    %v115 = vpack.c.bf16 %v98, %v97
    %v118 = vunpack.c.l.b16 %v95
    %v119 = vunpack.c.l.b16 %v96
    %v120 = vpack.c.b16 %v119, %v118
    %122 = vxpose.xlu0.c.b16.start [1/8] %v120, 128
    %123 = vxpose.xlu0.c.b16.cont [2/8] 0, 128
    %124 = vxpose.xlu0.c.b16.cont [3/8] 0, 128
    %125 = vxpose.xlu0.c.b16.cont [4/8] 0, 128
    %126 = vxpose.xlu0.c.b16.cont [5/8] 0, 128
    %127 = vxpose.xlu0.c.b16.cont [6/8] 0, 128
    %128 = vxpose.xlu0.c.b16.cont [7/8] 0, 128
    %129 = vxpose.xlu0.c.b16.end [8/8] 0, 128
    %v130 = vpop.trf.xlu0
    %v131 = vpop.trf.xlu0
    %v132 = vpop.trf.xlu0
    %v133 = vpop.trf.xlu0
    %v134 = vpop.trf.xlu0
    %v135 = vpop.trf.xlu0
    %v136 = vpop.trf.xlu0
    %v137 = vpop.trf.xlu0
    %vm138 = vcmask 130048
    %v140 = vsel %vm138, %v130, 0
    %v143 = vsel %vm138, %v131, 0
    %v146 = vsel %vm138, %v132, 0
    %v149 = vsel %vm138, %v133, 0
    %v152 = vsel %vm138, %v134, 0
    %v155 = vsel %vm138, %v135, 0
    %v158 = vsel %vm138, %v136, 0
    %v161 = vsel %vm138, %v137, 0
    %163 = vmatprep.subr.bf16.mxu0 0
    %164 = vmatpush1.bf16.msra.mxu0 0
    %165 = vmatprep.subr.bf16.mxu0 0
    %166 = vmatpush1.bf16.msra.mxu0 0
    %167 = vmatprep.subr.bf16.mxu0 0
    %168 = vmatpush1.bf16.msra.mxu0 0
    %169 = vmatprep.subr.bf16.mxu0 0
    %170 = vmatpush1.bf16.msra.mxu0 0
    %171 = vmatprep.subr.bf16.mxu0 0
    %172 = vmatpush1.bf16.msra.mxu0 0
    %173 = vmatprep.subr.bf16.mxu0 0
    %174 = vmatpush1.bf16.msra.mxu0 0
    %175 = vmatprep.subr.bf16.mxu0 0
    %176 = vmatpush1.bf16.msra.mxu0 0
    %177 = vmatprep.subr.bf16.mxu0 0
    %178 = vmatpush1.bf16.msra.mxu0 %v115
    %179 = vmatprep.subr.bf16.mxu0 0
    %180 = vmatpush2.bf16.msra.mxu0 0
    %181 = vmatprep.subr.bf16.mxu0 0
    %182 = vmatpush2.bf16.msra.mxu0 0
    %183 = vmatprep.subr.bf16.mxu0 0
    %184 = vmatpush2.bf16.msra.mxu0 0
    %185 = vmatprep.subr.bf16.mxu0 0
    %186 = vmatpush2.bf16.msra.mxu0 0
    %187 = vmatprep.subr.bf16.mxu0 0
    %188 = vmatpush2.bf16.msra.mxu0 0
    %189 = vmatprep.subr.bf16.mxu0 0
    %190 = vmatpush2.bf16.msra.mxu0 0
    %191 = vmatprep.subr.bf16.mxu0 0
    %192 = vmatpush2.bf16.msra.mxu0 0
    %193 = vmatprep.subr.bf16.mxu0 0
    %194 = vmatpush2.bf16.msra.mxu0 0
    %195 = vmatprep.mubr.bf16.mxu0 0
    %196 = vmatmul.mubr.bf16.gmra.mxu0 %v140
    %v197 = vpop.f32.mrf.mxu0
    %v198 = vadd.f32 0.0, %v197
    %v199 = vpop.f32.mrf.mxu0
    %v200 = vpop.f32.mrf.mxu0
    %v201 = vadd.f32 0.0, %v200
    %v202 = vpop.f32.mrf.mxu0
    %203 = vmatprep.mubr.bf16.mxu0 0
    %204 = vmatmul.mubr.bf16.gmra.mxu0 %v143
    %v205 = vpop.f32.mrf.mxu0
    %v206 = vadd.f32 0.0, %v205
    %v207 = vpop.f32.mrf.mxu0
    %v208 = vpop.f32.mrf.mxu0
    %v209 = vadd.f32 0.0, %v208
    %v210 = vpop.f32.mrf.mxu0
    %211 = vmatprep.mubr.bf16.mxu0 0
    %212 = vmatmul.mubr.bf16.gmra.mxu0 %v146
    %v213 = vpop.f32.mrf.mxu0
    %v214 = vadd.f32 0.0, %v213
    %v215 = vpop.f32.mrf.mxu0
    %v216 = vpop.f32.mrf.mxu0
    %v217 = vadd.f32 0.0, %v216
    %v218 = vpop.f32.mrf.mxu0
    %219 = vmatprep.mubr.bf16.mxu0 0
    %220 = vmatmul.mubr.bf16.gmra.mxu0 %v149
    %v221 = vpop.f32.mrf.mxu0
    %v222 = vadd.f32 0.0, %v221
    %v223 = vpop.f32.mrf.mxu0
    %v224 = vpop.f32.mrf.mxu0
    %v225 = vadd.f32 0.0, %v224
    %v226 = vpop.f32.mrf.mxu0
    %227 = vmatprep.mubr.bf16.mxu0 0
    %228 = vmatmul.mubr.bf16.gmra.mxu0 %v152
    %v229 = vpop.f32.mrf.mxu0
    %v230 = vadd.f32 0.0, %v229
    %v231 = vpop.f32.mrf.mxu0
    %v232 = vpop.f32.mrf.mxu0
    %v233 = vadd.f32 0.0, %v232
    %v234 = vpop.f32.mrf.mxu0
    %235 = vmatprep.mubr.bf16.mxu0 0
    %236 = vmatmul.mubr.bf16.gmra.mxu0 %v155
    %v237 = vpop.f32.mrf.mxu0
    %v238 = vadd.f32 0.0, %v237
    %v239 = vpop.f32.mrf.mxu0
    %v240 = vpop.f32.mrf.mxu0
    %v241 = vadd.f32 0.0, %v240
    %v242 = vpop.f32.mrf.mxu0
    %243 = vmatprep.mubr.bf16.mxu0 0
    %244 = vmatmul.mubr.bf16.gmra.mxu0 %v158
    %v245 = vpop.f32.mrf.mxu0
    %v246 = vadd.f32 0.0, %v245
    %v247 = vpop.f32.mrf.mxu0
    %v248 = vpop.f32.mrf.mxu0
    %v249 = vadd.f32 0.0, %v248
    %v250 = vpop.f32.mrf.mxu0
    %251 = vmatprep.mubr.bf16.mxu0 0
    %252 = vmatmul.mubr.bf16.gmra.mxu0 %v161
    %v253 = vpop.f32.mrf.mxu0
    %v254 = vadd.f32 0.0, %v253
    %v255 = vpop.f32.mrf.mxu0
    %v256 = vpop.f32.mrf.mxu0
    %v257 = vadd.f32 0.0, %v256
    %v258 = vpop.f32.mrf.mxu0
    %259 = vdwg.mxu0
    %v260 = vadd.f32 %v99, %v198
    %v261 = vadd.f32 %v100, %v201
    %v262 = vadd.f32 %v101, %v206
    %v263 = vadd.f32 %v102, %v209
    %v264 = vadd.f32 %v103, %v214
    %v265 = vadd.f32 %v104, %v217
    %v266 = vadd.f32 %v105, %v222
    %v267 = vadd.f32 %v106, %v225
    %v268 = vadd.f32 %v107, %v230
    %v269 = vadd.f32 %v108, %v233
    %v270 = vadd.f32 %v109, %v238
    %v271 = vadd.f32 %v110, %v241
    %v272 = vadd.f32 %v111, %v246
    %v273 = vadd.f32 %v112, %v249
    %v274 = vadd.f32 %v113, %v254
    %v275 = vadd.f32 %v114, %v257
    %276 = vst [vmem:[#allocation9] sm:$0xff] %v260
    %277 = vst [vmem:[#allocation9 + $0x8] sm:$0xff] %v261
    %278 = vst [vmem:[#allocation9 + $0x10] sm:$0xff] %v262
    %279 = vst [vmem:[#allocation9 + $0x18] sm:$0xff] %v263
    %280 = vst [vmem:[#allocation9 + $0x20] sm:$0xff] %v264
    %281 = vst [vmem:[#allocation9 + $0x28] sm:$0xff] %v265
    %282 = vst [vmem:[#allocation9 + $0x30] sm:$0xff] %v266
    %283 = vst [vmem:[#allocation9 + $0x38] sm:$0xff] %v267
    %284 = vst [vmem:[#allocation9 + $0x40] sm:$0xff] %v268
    %285 = vst [vmem:[#allocation9 + $0x48] sm:$0xff] %v269
    %286 = vst [vmem:[#allocation9 + $0x50] sm:$0xff] %v270
    %287 = vst [vmem:[#allocation9 + $0x58] sm:$0xff] %v271
    %288 = vst [vmem:[#allocation9 + $0x60] sm:$0xff] %v272
    %289 = vst [vmem:[#allocation9 + $0x68] sm:$0xff] %v273
    %290 = vst [vmem:[#allocation9 + $0x70] sm:$0xff] %v274
    %291 = vst [vmem:[#allocation9 + $0x78] sm:$0xff] %v275
    %v292 = vld [vmem:[#allocation2] sm:$0xff]
    %v293 = vld [vmem:[#allocation2 + $0x8] sm:$0xff]
    %v294 = vld [vmem:[#allocation2 + $0x10] sm:$0xff]
    %v295 = vld [vmem:[#allocation2 + $0x18] sm:$0xff]
    %v296 = vld [vmem:[#allocation2 + $0x20] sm:$0xff]
    %v297 = vld [vmem:[#allocation2 + $0x28] sm:$0xff]
    %v298 = vld [vmem:[#allocation2 + $0x30] sm:$0xff]
    %v299 = vld [vmem:[#allocation2 + $0x38] sm:$0xff]
    %v300 = vld [vmem:[#allocation2 + $0x40] sm:$0xff]
    %v301 = vld [vmem:[#allocation2 + $0x48] sm:$0xff]
    %v302 = vld [vmem:[#allocation2 + $0x50] sm:$0xff]
    %v303 = vld [vmem:[#allocation2 + $0x58] sm:$0xff]
    %v304 = vld [vmem:[#allocation2 + $0x60] sm:$0xff]
    %v305 = vld [vmem:[#allocation2 + $0x68] sm:$0xff]
    %v306 = vld [vmem:[#allocation2 + $0x70] sm:$0xff]
    %v307 = vld [vmem:[#allocation2 + $0x78] sm:$0xff]
    %308 = vmatprep.subr.bf16.mxu0 0
    %309 = vmatpush1.bf16.msra.mxu0 0
    %310 = vmatprep.subr.bf16.mxu0 0
    %311 = vmatpush1.bf16.msra.mxu0 0
    %312 = vmatprep.subr.bf16.mxu0 0
    %313 = vmatpush1.bf16.msra.mxu0 0
    %314 = vmatprep.subr.bf16.mxu0 0
    %315 = vmatpush1.bf16.msra.mxu0 0
    %316 = vmatprep.subr.bf16.mxu0 0
    %317 = vmatpush1.bf16.msra.mxu0 0
    %318 = vmatprep.subr.bf16.mxu0 0
    %319 = vmatpush1.bf16.msra.mxu0 0
    %320 = vmatprep.subr.bf16.mxu0 0
    %321 = vmatpush1.bf16.msra.mxu0 0
    %322 = vmatprep.subr.bf16.mxu0 0
    %323 = vmatpush1.bf16.msra.mxu0 1065369472
    %324 = vmatprep.subr.bf16.mxu0 0
    %325 = vmatpush2.bf16.msra.mxu0 0
    %326 = vmatprep.subr.bf16.mxu0 0
    %327 = vmatpush2.bf16.msra.mxu0 0
    %328 = vmatprep.subr.bf16.mxu0 0
    %329 = vmatpush2.bf16.msra.mxu0 0
    %330 = vmatprep.subr.bf16.mxu0 0
    %331 = vmatpush2.bf16.msra.mxu0 0
    %332 = vmatprep.subr.bf16.mxu0 0
    %333 = vmatpush2.bf16.msra.mxu0 0
    %334 = vmatprep.subr.bf16.mxu0 0
    %335 = vmatpush2.bf16.msra.mxu0 0
    %336 = vmatprep.subr.bf16.mxu0 0
    %337 = vmatpush2.bf16.msra.mxu0 0
    %338 = vmatprep.subr.bf16.mxu0 0
    %339 = vmatpush2.bf16.msra.mxu0 0
    %340 = vmatprep.mubr.bf16.mxu0 0
    %341 = vmatmul.mubr.bf16.gmra.mxu0 %v140
    %v342 = vpop.f32.mrf.mxu0
    %v343 = vadd.f32 0.0, %v342
    %v344 = vpop.f32.mrf.mxu0
    %v345 = vpop.f32.mrf.mxu0
    %v346 = vadd.f32 0.0, %v345
    %v347 = vpop.f32.mrf.mxu0
    %348 = vmatprep.mubr.bf16.mxu0 0
    %349 = vmatmul.mubr.bf16.gmra.mxu0 %v143
    %v350 = vpop.f32.mrf.mxu0
    %v351 = vadd.f32 0.0, %v350
    %v352 = vpop.f32.mrf.mxu0
    %v353 = vpop.f32.mrf.mxu0
    %v354 = vadd.f32 0.0, %v353
    %v355 = vpop.f32.mrf.mxu0
    %356 = vmatprep.mubr.bf16.mxu0 0
    %357 = vmatmul.mubr.bf16.gmra.mxu0 %v146
    %v358 = vpop.f32.mrf.mxu0
    %v359 = vadd.f32 0.0, %v358
    %v360 = vpop.f32.mrf.mxu0
    %v361 = vpop.f32.mrf.mxu0
    %v362 = vadd.f32 0.0, %v361
    %v363 = vpop.f32.mrf.mxu0
    %364 = vmatprep.mubr.bf16.mxu0 0
    %365 = vmatmul.mubr.bf16.gmra.mxu0 %v149
    %v366 = vpop.f32.mrf.mxu0
    %v367 = vadd.f32 0.0, %v366
    %v368 = vpop.f32.mrf.mxu0
    %v369 = vpop.f32.mrf.mxu0
    %v370 = vadd.f32 0.0, %v369
    %v371 = vpop.f32.mrf.mxu0
    %372 = vmatprep.mubr.bf16.mxu0 0
    %373 = vmatmul.mubr.bf16.gmra.mxu0 %v152
    %v374 = vpop.f32.mrf.mxu0
    %v375 = vadd.f32 0.0, %v374
    %v376 = vpop.f32.mrf.mxu0
    %v377 = vpop.f32.mrf.mxu0
    %v378 = vadd.f32 0.0, %v377
    %v379 = vpop.f32.mrf.mxu0
    %380 = vmatprep.mubr.bf16.mxu0 0
    %381 = vmatmul.mubr.bf16.gmra.mxu0 %v155
    %v382 = vpop.f32.mrf.mxu0
    %v383 = vadd.f32 0.0, %v382
    %v384 = vpop.f32.mrf.mxu0
    %v385 = vpop.f32.mrf.mxu0
    %v386 = vadd.f32 0.0, %v385
    %v387 = vpop.f32.mrf.mxu0
    %388 = vmatprep.mubr.bf16.mxu0 0
    %389 = vmatmul.mubr.bf16.gmra.mxu0 %v158
    %v390 = vpop.f32.mrf.mxu0
    %v391 = vadd.f32 0.0, %v390
    %v392 = vpop.f32.mrf.mxu0
    %v393 = vpop.f32.mrf.mxu0
    %v394 = vadd.f32 0.0, %v393
    %v395 = vpop.f32.mrf.mxu0
    %396 = vmatprep.mubr.bf16.mxu0 0
    %397 = vmatmul.mubr.bf16.gmra.mxu0 %v161
    %v398 = vpop.f32.mrf.mxu0
    %v399 = vadd.f32 0.0, %v398
    %v400 = vpop.f32.mrf.mxu0
    %v401 = vpop.f32.mrf.mxu0
    %v402 = vadd.f32 0.0, %v401
    %v403 = vpop.f32.mrf.mxu0
    %404 = vdwg.mxu0
    %v405 = vadd.f32 %v292, %v343
    %v406 = vadd.f32 %v293, %v346
    %v407 = vadd.f32 %v294, %v351
    %v408 = vadd.f32 %v295, %v354
    %v409 = vadd.f32 %v296, %v359
    %v410 = vadd.f32 %v297, %v362
    %v411 = vadd.f32 %v298, %v367
    %v412 = vadd.f32 %v299, %v370
    %v413 = vadd.f32 %v300, %v375
    %v414 = vadd.f32 %v301, %v378
    %v415 = vadd.f32 %v302, %v383
    %v416 = vadd.f32 %v303, %v386
    %v417 = vadd.f32 %v304, %v391
    %v418 = vadd.f32 %v305, %v394
    %v419 = vadd.f32 %v306, %v399
    %v420 = vadd.f32 %v307, %v402
    %vm421 = vcmask 7168
    %422 = vst.msk [vmem:[#allocation2] sm:$0xff] %vm421, %v405
    %423 = vst.msk [vmem:[#allocation2 + $0x8] sm:$0xff] %vm421, %v406
    %424 = vst.msk [vmem:[#allocation2 + $0x10] sm:$0xff] %vm421, %v407
    %425 = vst.msk [vmem:[#allocation2 + $0x18] sm:$0xff] %vm421, %v408
    %426 = vst.msk [vmem:[#allocation2 + $0x20] sm:$0xff] %vm421, %v409
    %427 = vst.msk [vmem:[#allocation2 + $0x28] sm:$0xff] %vm421, %v410
    %428 = vst.msk [vmem:[#allocation2 + $0x30] sm:$0xff] %vm421, %v411
    %429 = vst.msk [vmem:[#allocation2 + $0x38] sm:$0xff] %vm421, %v412
    %430 = vst.msk [vmem:[#allocation2 + $0x40] sm:$0xff] %vm421, %v413
    %431 = vst.msk [vmem:[#allocation2 + $0x48] sm:$0xff] %vm421, %v414
    %432 = vst.msk [vmem:[#allocation2 + $0x50] sm:$0xff] %vm421, %v415
    %433 = vst.msk [vmem:[#allocation2 + $0x58] sm:$0xff] %vm421, %v416
    %434 = vst.msk [vmem:[#allocation2 + $0x60] sm:$0xff] %vm421, %v417
    %435 = vst.msk [vmem:[#allocation2 + $0x68] sm:$0xff] %vm421, %v418
    %436 = vst.msk [vmem:[#allocation2 + $0x70] sm:$0xff] %vm421, %v419
    %437 = vst.msk [vmem:[#allocation2 + $0x78] sm:$0xff] %vm421, %v420
    // Predicated region
    $region30: #{tpu_custom_call.1} parent=1 // pred_check
      %p438 = pneg %p58
    $region31: #{tpu_custom_call.1} parent=1 // pred_check_branch
      %440 = sbr.rel (%p438) target = $region33
    $region32: #{tpu_custom_call.1} parent=1 // pred_region
      %v441 = vld [vmem:[#allocation2] sm:$0xff]
      %v442 = vld [vmem:[#allocation2 + $0x8] sm:$0xff]
      %v443 = vld [vmem:[#allocation2 + $0x10] sm:$0xff]
      %v444 = vld [vmem:[#allocation2 + $0x18] sm:$0xff]
      %v445 = vld [vmem:[#allocation2 + $0x20] sm:$0xff]
      %v446 = vld [vmem:[#allocation2 + $0x28] sm:$0xff]
      %v447 = vld [vmem:[#allocation2 + $0x30] sm:$0xff]
      %v448 = vld [vmem:[#allocation2 + $0x38] sm:$0xff]
      %v449 = vld [vmem:[#allocation2 + $0x40] sm:$0xff]
      %v450 = vld [vmem:[#allocation2 + $0x48] sm:$0xff]
      %v451 = vld [vmem:[#allocation2 + $0x50] sm:$0xff]
      %v452 = vld [vmem:[#allocation2 + $0x58] sm:$0xff]
      %v453 = vld [vmem:[#allocation2 + $0x60] sm:$0xff]
      %v454 = vld [vmem:[#allocation2 + $0x68] sm:$0xff]
      %v455 = vld [vmem:[#allocation2 + $0x70] sm:$0xff]
      %v456 = vld [vmem:[#allocation2 + $0x78] sm:$0xff]
      %v457 = vadd.f32 %v441, 1e-06
      %v458 = vadd.f32 %v442, 1e-06
      %v459 = vadd.f32 %v443, 1e-06
      %v460 = vadd.f32 %v444, 1e-06
      %v461 = vadd.f32 %v445, 1e-06
      %v462 = vadd.f32 %v446, 1e-06
      %v463 = vadd.f32 %v447, 1e-06
      %v464 = vadd.f32 %v448, 1e-06
      %v465 = vadd.f32 %v449, 1e-06
      %v466 = vadd.f32 %v450, 1e-06
      %v467 = vadd.f32 %v451, 1e-06
      %v468 = vadd.f32 %v452, 1e-06
      %v469 = vadd.f32 %v453, 1e-06
      %v470 = vadd.f32 %v454, 1e-06
      %v471 = vadd.f32 %v455, 1e-06
      %v472 = vadd.f32 %v456, 1e-06
      %v473 = vrcp.pop %v457
      %v474 = vmul.f32 1.0, %v473
      %v475 = vrcp.pop %v458
      %v476 = vmul.f32 1.0, %v475
      %v477 = vrcp.pop %v459
      %v478 = vmul.f32 1.0, %v477
      %v479 = vrcp.pop %v460
      %v480 = vmul.f32 1.0, %v479
      %v481 = vrcp.pop %v461
      %v482 = vmul.f32 1.0, %v481
      %v483 = vrcp.pop %v462
      %v484 = vmul.f32 1.0, %v483
      %v485 = vrcp.pop %v463
      %v486 = vmul.f32 1.0, %v485
      %v487 = vrcp.pop %v464
      %v488 = vmul.f32 1.0, %v487
      %v489 = vrcp.pop %v465
      %v490 = vmul.f32 1.0, %v489
      %v491 = vrcp.pop %v466
      %v492 = vmul.f32 1.0, %v491
      %v493 = vrcp.pop %v467
      %v494 = vmul.f32 1.0, %v493
      %v495 = vrcp.pop %v468
      %v496 = vmul.f32 1.0, %v495
      %v497 = vrcp.pop %v469
      %v498 = vmul.f32 1.0, %v497
      %v499 = vrcp.pop %v470
      %v500 = vmul.f32 1.0, %v499
      %v501 = vrcp.pop %v471
      %v502 = vmul.f32 1.0, %v501
      %v503 = vrcp.pop %v472
      %v504 = vmul.f32 1.0, %v503
      %v505 = vld [vmem:[#allocation9] sm:$0xff]
      %v506 = vld [vmem:[#allocation9 + $0x8] sm:$0xff]
      %v507 = vld [vmem:[#allocation9 + $0x10] sm:$0xff]
      %v508 = vld [vmem:[#allocation9 + $0x18] sm:$0xff]
      %v509 = vld [vmem:[#allocation9 + $0x20] sm:$0xff]
      %v510 = vld [vmem:[#allocation9 + $0x28] sm:$0xff]
      %v511 = vld [vmem:[#allocation9 + $0x30] sm:$0xff]
      %v512 = vld [vmem:[#allocation9 + $0x38] sm:$0xff]
      %v513 = vld [vmem:[#allocation9 + $0x40] sm:$0xff]
      %v514 = vld [vmem:[#allocation9 + $0x48] sm:$0xff]
      %v515 = vld [vmem:[#allocation9 + $0x50] sm:$0xff]
      %v516 = vld [vmem:[#allocation9 + $0x58] sm:$0xff]
      %v517 = vld [vmem:[#allocation9 + $0x60] sm:$0xff]
      %v518 = vld [vmem:[#allocation9 + $0x68] sm:$0xff]
      %v519 = vld [vmem:[#allocation9 + $0x70] sm:$0xff]
      %v520 = vld [vmem:[#allocation9 + $0x78] sm:$0xff]
      %522 = vset.pattern.permute.xlu0 0
      %523 = vperm.xlu0 %522, %v474
      %v524 = vpop.permute.xlu0 %523
      %527 = vset.pattern.permute.xlu0 0
      %528 = vperm.xlu0 %527, %v476
      %v529 = vpop.permute.xlu0 %528
      %532 = vset.pattern.permute.xlu0 0
      %533 = vperm.xlu0 %532, %v478
      %v534 = vpop.permute.xlu0 %533
      %537 = vset.pattern.permute.xlu0 0
      %538 = vperm.xlu0 %537, %v480
      %v539 = vpop.permute.xlu0 %538
      %542 = vset.pattern.permute.xlu0 0
      %543 = vperm.xlu0 %542, %v482
      %v544 = vpop.permute.xlu0 %543
      %547 = vset.pattern.permute.xlu0 0
      %548 = vperm.xlu0 %547, %v484
      %v549 = vpop.permute.xlu0 %548
      %552 = vset.pattern.permute.xlu0 0
      %553 = vperm.xlu0 %552, %v486
      %v554 = vpop.permute.xlu0 %553
      %557 = vset.pattern.permute.xlu0 0
      %558 = vperm.xlu0 %557, %v488
      %v559 = vpop.permute.xlu0 %558
      %562 = vset.pattern.permute.xlu0 0
      %563 = vperm.xlu0 %562, %v490
      %v564 = vpop.permute.xlu0 %563
      %567 = vset.pattern.permute.xlu0 0
      %568 = vperm.xlu0 %567, %v492
      %v569 = vpop.permute.xlu0 %568
      %572 = vset.pattern.permute.xlu0 0
      %573 = vperm.xlu0 %572, %v494
      %v574 = vpop.permute.xlu0 %573
      %577 = vset.pattern.permute.xlu0 0
      %578 = vperm.xlu0 %577, %v496
      %v579 = vpop.permute.xlu0 %578
      %582 = vset.pattern.permute.xlu0 0
      %583 = vperm.xlu0 %582, %v498
      %v584 = vpop.permute.xlu0 %583
      %587 = vset.pattern.permute.xlu0 0
      %588 = vperm.xlu0 %587, %v500
      %v589 = vpop.permute.xlu0 %588
      %592 = vset.pattern.permute.xlu0 0
      %593 = vperm.xlu0 %592, %v502
      %v594 = vpop.permute.xlu0 %593
      %597 = vset.pattern.permute.xlu0 0
      %598 = vperm.xlu0 %597, %v504
      %v599 = vpop.permute.xlu0 %598
      %v601 = vmul.f32 %v524, %v505
      %v602 = vmul.f32 %v529, %v506
      %v603 = vmul.f32 %v534, %v507
      %v604 = vmul.f32 %v539, %v508
      %v605 = vmul.f32 %v544, %v509
      %v606 = vmul.f32 %v549, %v510
      %v607 = vmul.f32 %v554, %v511
      %v608 = vmul.f32 %v559, %v512
      %v609 = vmul.f32 %v564, %v513
      %v610 = vmul.f32 %v569, %v514
      %v611 = vmul.f32 %v574, %v515
      %v612 = vmul.f32 %v579, %v516
      %v613 = vmul.f32 %v584, %v517
      %v614 = vmul.f32 %v589, %v518
      %v615 = vmul.f32 %v594, %v519
      %v616 = vmul.f32 %v599, %v520
      %617 = vst [vmem:[#allocation9] sm:$0xff] %v601
      %618 = vst [vmem:[#allocation9 + $0x8] sm:$0xff] %v602
      %619 = vst [vmem:[#allocation9 + $0x10] sm:$0xff] %v603
      %620 = vst [vmem:[#allocation9 + $0x18] sm:$0xff] %v604
      %621 = vst [vmem:[#allocation9 + $0x20] sm:$0xff] %v605
      %622 = vst [vmem:[#allocation9 + $0x28] sm:$0xff] %v606
      %623 = vst [vmem:[#allocation9 + $0x30] sm:$0xff] %v607
      %624 = vst [vmem:[#allocation9 + $0x38] sm:$0xff] %v608
      %625 = vst [vmem:[#allocation9 + $0x40] sm:$0xff] %v609
      %626 = vst [vmem:[#allocation9 + $0x48] sm:$0xff] %v610
      %627 = vst [vmem:[#allocation9 + $0x50] sm:$0xff] %v611
      %628 = vst [vmem:[#allocation9 + $0x58] sm:$0xff] %v612
      %629 = vst [vmem:[#allocation9 + $0x60] sm:$0xff] %v613
      %630 = vst [vmem:[#allocation9 + $0x68] sm:$0xff] %v614
      %631 = vst [vmem:[#allocation9 + $0x70] sm:$0xff] %v615
      %632 = vst [vmem:[#allocation9 + $0x78] sm:$0xff] %v616
    $region33: #{tpu_custom_call.1} parent=1 // pred_fallthru
      _
    // Predicated region
    $region34: #{tpu_custom_call.1} parent=1 // pred_check
      _
    $region35: #{tpu_custom_call.1} parent=1 // pred_check_branch
      %634 = sbr.rel (0) target = $region37
    $region36: #{tpu_custom_call.1} parent=1 // pred_region
      %s636 = ssub.s32 2048, 2048
      %637 = vsyncadd [#allocation5], %s636
      %s638 = sshll.u32 [#allocation9], 4
      %s639 = int_to_ptr.vmem [resolvable:$true] %s638
      %644 = dma.vmem_to_hbm [thread:$0]  %s639, 2048, %s3, [#allocation5], 128, 128, 8
    $region37: #{tpu_custom_call.1} parent=1 // pred_fallthru
      _
    // Predicated region
    $region38: #{tpu_custom_call.1} parent=1 // pred_check
      _
    $region39: #{tpu_custom_call.1} parent=1 // pred_check_branch
      %646 = sbr.rel (0) target = $region41
    $region40: #{tpu_custom_call.1} parent=1 // pred_region
      %647 = dma.done [#allocation5], 2048
    $region41: #{tpu_custom_call.1} parent=1 // pred_fallthru
      _
    %648 = vsyncpa [#allocation4], 1
    %649 = vsyncpa [#allocation7], 1
    %650 = vsyncpa [#allocation5], 1

</llo_original>
